<compile_context>
chip_gen: v7x
topology: tpu7x:2x2x1
jax: 0.10.0
libtpu: 0.0.40
codegen_flags: <defaults>
</compile_context>

<pallas_src>
import functools
import math

import jax
import jax.numpy as jnp
from jax.experimental import pallas as pl
from jax.experimental.pallas import tpu as pltpu


def _round_up(x, m):
    return ((x + m - 1) // m) * m


# -----------------------------------------------------------------------------
# Fused Pallas kernel:
#   layer 1 (K=2) on the VPU in f32, layers 2/3 on the MXU (bf16, f32 acc)
# -----------------------------------------------------------------------------
def _mlp_fused_kernel(x_ref, w1_ref, b1_ref, w2_ref, b2_ref, w3_ref, b3_ref, o_ref):
    # x: (TM, 2) f32 ; w1: (2, H1) f32 ; w2: (H1, H2) bf16 ; w3: (H2, NP) bf16
    # b1/b2: (1, H) f32 ; b3: (1, NP) f32 ; o: (TM, NP) f32
    x = x_ref[...]
    w1 = w1_ref[...]

    # Layer 1: K=2 contraction as broadcast FMAs on the VPU (no MXU, no K pad).
    h = b1_ref[...]
    for f in range(x.shape[1]):                              # unrolled, F == 2
        h = h + x[:, f:f + 1] * w1[f:f + 1, :]
    h = jnp.maximum(h, 0.0).astype(w2_ref.dtype)             # (TM, H1) bf16

    # Layer 2: (TM, H1) @ (H1, H2) on the MXU, f32 accumulation.
    h = jnp.dot(h, w2_ref[...], preferred_element_type=jnp.float32)
    h = jnp.maximum(h + b2_ref[...], 0.0).astype(w3_ref.dtype)

    # Layer 3: (TM, H2) @ (H2, NP), no activation.
    y = jnp.dot(h, w3_ref[...], preferred_element_type=jnp.float32) + b3_ref[...]
    o_ref[...] = y.astype(o_ref.dtype)


# -----------------------------------------------------------------------------
# One-time parameter preparation (hoisted off the per-call hot path)
# -----------------------------------------------------------------------------
def prepare_params(params, *, compute_dtype=jnp.bfloat16):
    """Cast / lane-pad parameters once; reuse the result across forward calls."""
    w1 = params["w1"].astype(jnp.float32)                     # (2, H1)  VPU layer
    b1 = params["b1"].astype(jnp.float32).reshape(1, -1)      # (1, H1)
    w2 = params["w2"].astype(compute_dtype)                   # (H1, H2) MXU
    b2 = params["b2"].astype(jnp.float32).reshape(1, -1)      # (1, H2)
    w3 = params["w3"]
    b3 = params["b3"]
    H2, N = w3.shape
    NP = _round_up(N, 128)                                    # lane-dense output
    w3p = jnp.zeros((H2, NP), compute_dtype).at[:, :N].set(w3.astype(compute_dtype))
    b3p = jnp.zeros((1, NP), jnp.float32).at[0, :N].set(b3.astype(jnp.float32))
    return {"w1": w1, "b1": b1, "w2": w2, "b2": b2, "w3p": w3p, "b3p": b3p}


# -----------------------------------------------------------------------------
# Wrapper: batch tiling + pallas_call
# -----------------------------------------------------------------------------
def mlp_state_forward(x, prepped, *, n_out, tm_max=1024):
    """Forward pass of MLP_state. x: (B, 2) f32 -> (B, n_out) f32."""
    B, F = x.shape
    w1, b1 = prepped["w1"], prepped["b1"]
    w2, b2 = prepped["w2"], prepped["b2"]
    w3p, b3p = prepped["w3p"], prepped["b3p"]
    H1 = w1.shape[1]
    H2 = w2.shape[1]
    NP = w3p.shape[1]
    assert w1.shape[0] == F, "MLP_state expects 2 input features"

    x = x.astype(jnp.float32)
    TM = min(tm_max, _round_up(B, 16))           # bf16-sublane-friendly M tile
    BP = _round_up(B, TM)                        # padded batch (only if ragged)
    xp = x if BP == B else jnp.zeros((BP, F), jnp.float32).at[:B].set(x)

    grid = (BP // TM,)
    flops = 2 * BP * (F * H1 + H1 * H2 + H2 * NP)
    bytes_accessed = (
        xp.size * 4                                            # f32 input
        + (w1.size + b1.size + b2.size + b3p.size) * 4         # f32 params
        + (w2.size + w3p.size) * 2                             # bf16 weights
        + BP * NP * 4                                          # f32 output
    )

    out = pl.pallas_call(
        _mlp_fused_kernel,
        out_shape=jax.ShapeDtypeStruct((BP, NP), jnp.float32),
        grid=grid,
        in_specs=[
            pl.BlockSpec((TM, F), lambda i: (i, 0)),    # x streamed over batch
            pl.BlockSpec((F, H1), lambda i: (0, 0)),    # weights: VMEM-resident
            pl.BlockSpec((1, H1), lambda i: (0, 0)),
            pl.BlockSpec((H1, H2), lambda i: (0, 0)),
            pl.BlockSpec((1, H2), lambda i: (0, 0)),
            pl.BlockSpec((H2, NP), lambda i: (0, 0)),
            pl.BlockSpec((1, NP), lambda i: (0, 0)),
        ],
        out_specs=pl.BlockSpec((TM, NP), lambda i: (i, 0)),
        compiler_params=pltpu.CompilerParams(
            dimension_semantics=("parallel",),          # 2-TC batch split on v7x
            vmem_limit_bytes=32 * 1024 * 1024,          # headroom, safe on v7x
        ),
        cost_estimate=pl.CostEstimate(
            flops=flops, transcendentals=0, bytes_accessed=bytes_accessed),
    )(xp, w1, b1, w2, b2, w3p, b3p)

    return out[:B, :n_out]


# -----------------------------------------------------------------------------
# Parameter init (mimics PyTorch nn.Linear default uniform bounds)
# -----------------------------------------------------------------------------
def _uniform(key, shape, fan_in):
    bound = 1.0 / math.sqrt(fan_in)
    return jax.random.uniform(key, shape, jnp.float32, -bound, bound)


def init_params(key, outputs):
    ks = jax.random.split(key, 6)
    p = {}
    p["w1"] = _uniform(ks[0], (2, 512), 2)
    p["b1"] = _uniform(ks[1], (512,), 2)
    p["w2"] = _uniform(ks[2], (512, 512), 512)
    p["b2"] = _uniform(ks[3], (512,), 512)
    p["w3"] = _uniform(ks[4], (512, outputs), 512)
    p["b3"] = _uniform(ks[5], (outputs,), 512)
    return p


def reference_forward(x, params):
    h = jnp.maximum(x @ params["w1"] + params["b1"], 0.0)
    h = jnp.maximum(h @ params["w2"] + params["b2"], 0.0)
    return h @ params["w3"] + params["b3"]


# -----------------------------------------------------------------------------
if __name__ == "__main__":
    OUTPUTS = 6
    B = 2

    key = jax.random.PRNGKey(0)
    k_in, k_par, k_in2 = jax.random.split(key, 3)

    params = init_params(k_par, OUTPUTS)
    prepped = prepare_params(params)              # pad/cast once, outside jit

    # --- small latency-style batch (B=2), single grid step -------------------
    x = jax.random.normal(k_in, (B, 2), jnp.float32)
    fwd = jax.jit(functools.partial(mlp_state_forward, n_out=OUTPUTS))
    out = jax.block_until_ready(fwd(x, prepped))
    assert out.shape == (B, OUTPUTS), out.shape
    ref = reference_forward(x, params)
    max_err = float(jnp.max(jnp.abs(out - ref)))
    assert bool(jnp.allclose(out, ref, atol=5e-2, rtol=5e-2)), max_err

    # --- ragged batch with a multi-step grid (exercises batch pad + tiling) --
    B2 = 50
    x2 = jax.random.normal(k_in2, (B2, 2), jnp.float32)
    fwd2 = jax.jit(functools.partial(mlp_state_forward, n_out=OUTPUTS, tm_max=32))
    out2 = jax.block_until_ready(fwd2(x2, prepped))
    assert out2.shape == (B2, OUTPUTS), out2.shape
    ref2 = reference_forward(x2, params)
    max_err2 = float(jnp.max(jnp.abs(out2 - ref2)))
    assert bool(jnp.allclose(out2, ref2, atol=5e-2, rtol=5e-2)), max_err2

    print("KERNEL_OK")
</pallas_src>

<mosaic_0001>
module attributes {stable_mosaic.version = 11 : i64} {
  func.func @_mlp_fused_kernel(%arg0: i32, %arg1: memref<16x2xf32, #tpu.memory_space<vmem>>, %arg2: memref<2x512xf32, #tpu.memory_space<vmem>>, %arg3: memref<1x512xf32, #tpu.memory_space<vmem>>, %arg4: memref<512x512xbf16, #tpu.memory_space<vmem>>, %arg5: memref<1x512xf32, #tpu.memory_space<vmem>>, %arg6: memref<512x128xbf16, #tpu.memory_space<vmem>>, %arg7: memref<1x128xf32, #tpu.memory_space<vmem>>, %arg8: memref<16x128xf32, #tpu.memory_space<vmem>>) attributes {dimension_semantics = [#tpu.dimension_semantics<parallel>], iteration_bounds = array<i64: 1>, scalar_prefetch = 0 : i64, scratch_operands = 0 : i64, tpu.core_type = #tpu.core_type<tc>, window_params = [{transform_indices = @transform_0, window_bounds = array<i64: 16, 2>}, {pipeline_mode = #tpu.pipeline_mode<synchronous>, transform_indices = @transform_1, window_bounds = array<i64: 2, 512>}, {pipeline_mode = #tpu.pipeline_mode<synchronous>, transform_indices = @transform_2, window_bounds = array<i64: 1, 512>}, {pipeline_mode = #tpu.pipeline_mode<synchronous>, transform_indices = @transform_3, window_bounds = array<i64: 512, 512>}, {pipeline_mode = #tpu.pipeline_mode<synchronous>, transform_indices = @transform_4, window_bounds = array<i64: 1, 512>}, {pipeline_mode = #tpu.pipeline_mode<synchronous>, transform_indices = @transform_5, window_bounds = array<i64: 512, 128>}, {pipeline_mode = #tpu.pipeline_mode<synchronous>, transform_indices = @transform_6, window_bounds = array<i64: 1, 128>}, {transform_indices = @transform_7, window_bounds = array<i64: 16, 128>}]} {
    %c0 = arith.constant 0 : index
    %c0_0 = arith.constant 0 : index
    %0 = vector.load %arg1[%c0, %c0_0] : memref<16x2xf32, #tpu.memory_space<vmem>>, vector<16x2xf32>
    %c0_1 = arith.constant 0 : index
    %c0_2 = arith.constant 0 : index
    %1 = vector.load %arg2[%c0_1, %c0_2] : memref<2x512xf32, #tpu.memory_space<vmem>>, vector<2x512xf32>
    %c0_3 = arith.constant 0 : index
    %c0_4 = arith.constant 0 : index
    %2 = vector.load %arg3[%c0_3, %c0_4] : memref<1x512xf32, #tpu.memory_space<vmem>>, vector<1x512xf32>
    %3 = vector.extract_strided_slice %0 {offsets = [0, 0], sizes = [16, 1], strides = [1, 1]} : vector<16x2xf32> to vector<16x1xf32>
    %4 = vector.extract_strided_slice %1 {offsets = [0, 0], sizes = [1, 512], strides = [1, 1]} : vector<2x512xf32> to vector<1x512xf32>
    %5 = vector.broadcast %3 : vector<16x1xf32> to vector<16x512xf32>
    %6 = vector.broadcast %4 : vector<1x512xf32> to vector<16x512xf32>
    %7 = arith.mulf %5, %6 : vector<16x512xf32>
    %8 = vector.broadcast %2 : vector<1x512xf32> to vector<16x512xf32>
    %9 = arith.addf %8, %7 : vector<16x512xf32>
    %10 = vector.extract_strided_slice %0 {offsets = [0, 1], sizes = [16, 1], strides = [1, 1]} : vector<16x2xf32> to vector<16x1xf32>
    %11 = vector.extract_strided_slice %1 {offsets = [1, 0], sizes = [1, 512], strides = [1, 1]} : vector<2x512xf32> to vector<1x512xf32>
    %12 = vector.broadcast %10 : vector<16x1xf32> to vector<16x512xf32>
    %13 = vector.broadcast %11 : vector<1x512xf32> to vector<16x512xf32>
    %14 = arith.mulf %12, %13 : vector<16x512xf32>
    %15 = arith.addf %9, %14 : vector<16x512xf32>
    %cst = arith.constant 0.000000e+00 : f32
    %16 = vector.broadcast %cst : f32 to vector<16x512xf32>
    %17 = arith.maximumf %15, %16 : vector<16x512xf32>
    %18 = arith.truncf %17 : vector<16x512xf32> to vector<16x512xbf16>
    %c0_5 = arith.constant 0 : index
    %c0_6 = arith.constant 0 : index
    %19 = vector.load %arg4[%c0_5, %c0_6] : memref<512x512xbf16, #tpu.memory_space<vmem>>, vector<512x512xbf16>
    %cst_7 = arith.constant dense<0.000000e+00> : vector<16x512xf32>
    %20 = tpu.matmul %18, %19, %cst_7 {dimension_numbers = #tpu.dot_dimension_numbers<[1], [0], [0], [1], [0, 0, 1, 1], [], []>} : vector<16x512xbf16>, vector<512x512xbf16>, vector<16x512xf32> -> vector<16x512xf32>
    %c0_8 = arith.constant 0 : index
    %c0_9 = arith.constant 0 : index
    %21 = vector.load %arg5[%c0_8, %c0_9] : memref<1x512xf32, #tpu.memory_space<vmem>>, vector<1x512xf32>
    %22 = vector.broadcast %21 : vector<1x512xf32> to vector<16x512xf32>
    %23 = arith.addf %20, %22 : vector<16x512xf32>
    %cst_10 = arith.constant 0.000000e+00 : f32
    %24 = vector.broadcast %cst_10 : f32 to vector<16x512xf32>
    %25 = arith.maximumf %23, %24 : vector<16x512xf32>
    %26 = arith.truncf %25 : vector<16x512xf32> to vector<16x512xbf16>
    %c0_11 = arith.constant 0 : index
    %c0_12 = arith.constant 0 : index
    %27 = vector.load %arg6[%c0_11, %c0_12] : memref<512x128xbf16, #tpu.memory_space<vmem>>, vector<512x128xbf16>
    %cst_13 = arith.constant dense<0.000000e+00> : vector<16x128xf32>
    %28 = tpu.matmul %26, %27, %cst_13 {dimension_numbers = #tpu.dot_dimension_numbers<[1], [0], [0], [1], [0, 0, 1, 1], [], []>} : vector<16x512xbf16>, vector<512x128xbf16>, vector<16x128xf32> -> vector<16x128xf32>
    %c0_14 = arith.constant 0 : index
    %c0_15 = arith.constant 0 : index
    %29 = vector.load %arg7[%c0_14, %c0_15] : memref<1x128xf32, #tpu.memory_space<vmem>>, vector<1x128xf32>
    %30 = vector.broadcast %29 : vector<1x128xf32> to vector<16x128xf32>
    %31 = arith.addf %28, %30 : vector<16x128xf32>
    %c0_16 = arith.constant 0 : index
    %c0_17 = arith.constant 0 : index
    %32 = vector.load %arg8[%c0_16, %c0_17] : memref<16x128xf32, #tpu.memory_space<vmem>>, vector<16x128xf32>
    tpu.vector_store %arg8[%c0_16, %c0_17], %31 {strides = array<i32>} : memref<16x128xf32, #tpu.memory_space<vmem>>, vector<16x128xf32>,
    return
  }
  func.func @transform_0(%arg0: i32) -> (i32, i32) {
    %c0_i32 = arith.constant 0 : i32
    %c0_i32_0 = arith.constant 0 : i32
    return %arg0, %c0_i32 : i32, i32
  }
  func.func @transform_1(%arg0: i32) -> (i32, i32) {
    %c0_i32 = arith.constant 0 : i32
    %c0_i32_0 = arith.constant 0 : i32
    %c0_i32_1 = arith.constant 0 : i32
    return %c0_i32, %c0_i32_0 : i32, i32
  }
  func.func @transform_2(%arg0: i32) -> (i32, i32) {
    %c0_i32 = arith.constant 0 : i32
    %c0_i32_0 = arith.constant 0 : i32
    %c0_i32_1 = arith.constant 0 : i32
    return %c0_i32, %c0_i32_0 : i32, i32
  }
  func.func @transform_3(%arg0: i32) -> (i32, i32) {
    %c0_i32 = arith.constant 0 : i32
    %c0_i32_0 = arith.constant 0 : i32
    %c0_i32_1 = arith.constant 0 : i32
    return %c0_i32, %c0_i32_0 : i32, i32
  }
  func.func @transform_4(%arg0: i32) -> (i32, i32) {
    %c0_i32 = arith.constant 0 : i32
    %c0_i32_0 = arith.constant 0 : i32
    %c0_i32_1 = arith.constant 0 : i32
    return %c0_i32, %c0_i32_0 : i32, i32
  }
  func.func @transform_5(%arg0: i32) -> (i32, i32) {
    %c0_i32 = arith.constant 0 : i32
    %c0_i32_0 = arith.constant 0 : i32
    %c0_i32_1 = arith.constant 0 : i32
    return %c0_i32, %c0_i32_0 : i32, i32
  }
  func.func @transform_6(%arg0: i32) -> (i32, i32) {
    %c0_i32 = arith.constant 0 : i32
    %c0_i32_0 = arith.constant 0 : i32
    %c0_i32_1 = arith.constant 0 : i32
    return %c0_i32, %c0_i32_0 : i32, i32
  }
  func.func @transform_7(%arg0: i32) -> (i32, i32) {
    %c0_i32 = arith.constant 0 : i32
    %c0_i32_0 = arith.constant 0 : i32
    return %arg0, %c0_i32 : i32, i32
  }
}

</mosaic_0001>

<llo_original>
// kernel: mlp_state_forward.1
$region0: #{mlp_state_forward.1}
  #allocation0 [shape = 'u32[]', space=smem, size = 0x4, offset = 0x4, fixed_abs, tag = 'smem constant byte address 0x4 - core index']
  #allocation1 [shape = 'u32[144,128]{1,0:T(1,128)}', space=vmem, size = 0x12000, scoped, tag = 'internal scratch']
  %s0 = inlined_call_operand.vmem [shape: f32[16,2], index: 0, kind: input, shape index: {}]
  %s1 = inlined_call_operand.vmem [shape: f32[2,512], index: 1, kind: input, shape index: {}]
  %s2 = inlined_call_operand.vmem [shape: f32[1,512], index: 2, kind: input, shape index: {}]
  %s3 = inlined_call_operand.hbm [shape: bf16[512,512], index: 3, kind: input, shape index: {}]
  %s4 = inlined_call_operand.vmem [shape: f32[1,512], index: 4, kind: input, shape index: {}]
  %s5 = inlined_call_operand.hbm [shape: bf16[512,128], index: 5, kind: input, shape index: {}]
  %s6 = inlined_call_operand.vmem [shape: f32[1,128], index: 6, kind: input, shape index: {}]
  %s7 = inlined_call_operand.vmem [shape: f32[16,128], index: 7, kind: output, shape index: {}]
  %s8 = sld [smem:[#allocation0]]
  $region46: #{mlp_state_forward.1} parent=0
    _
  %s10 = ssub.s32 1, %s8
  %s11 = scalar_select 0, %s10, %s8
  $region1: #{mlp_state_forward.1} parent=0
    #allocation2 [shape = 'u8[524288]{0}', space=vmem, size = 0x80000, scoped, tag = 'input window, operand 3, single buffered']
    #allocation3 [shape = 's32[1]{0}', space=sflag, size = 0x4, scoped, tag = 'scoped memory for mlp_state_forward.1']
    #allocation4 [shape = 'u8[131072]{0}', space=vmem, size = 0x20000, scoped, tag = 'input window, operand 5, single buffered']
    #allocation5 [shape = 's32[1]{0}', space=sflag, size = 0x4, scoped, tag = 'scoped memory for mlp_state_forward.1']
    %12 = vsyncpa [#allocation3], 0
    %13 = vsyncpa [#allocation5], 0
    // Predicated region
    $region2: #{mlp_state_forward.1} parent=1 // pred_check
      _
    $region3: #{mlp_state_forward.1} parent=1 // pred_check_branch
      %15 = sbr.rel (0) target = $region5
    $region4: #{mlp_state_forward.1} parent=1 // pred_region
      _
    $region5: #{mlp_state_forward.1} parent=1 // pred_fallthru
      _
    // Predicated region
    $region6: #{mlp_state_forward.1} parent=1 // pred_check
      _
    $region7: #{mlp_state_forward.1} parent=1 // pred_check_branch
      %17 = sbr.rel (0) target = $region9
    $region8: #{mlp_state_forward.1} parent=1 // pred_region
      _
    $region9: #{mlp_state_forward.1} parent=1 // pred_fallthru
      _
    // Predicated region
    $region10: #{mlp_state_forward.1} parent=1 // pred_check
      _
    $region11: #{mlp_state_forward.1} parent=1 // pred_check_branch
      %19 = sbr.rel (0) target = $region13
    $region12: #{mlp_state_forward.1} parent=1 // pred_region
      _
    $region13: #{mlp_state_forward.1} parent=1 // pred_fallthru
      _
    // Predicated region
    $region14: #{mlp_state_forward.1} parent=1 // pred_check
      _
    $region15: #{mlp_state_forward.1} parent=1 // pred_check_branch
      %21 = sbr.rel (0) target = $region17
    $region16: #{mlp_state_forward.1} parent=1 // pred_region
      %s23 = ssub.s32 16384, 16384
      %24 = vsyncadd [#allocation3], %s23
      %s25 = sshll.u32 [#allocation2], 4
      %s26 = int_to_ptr.vmem [resolvable:$true] %s25
      %31 = dma.hbm_to_vmem [thread:$0]  %s3, 16384, %s26, [#allocation3], 256, 256, 16
    $region17: #{mlp_state_forward.1} parent=1 // pred_fallthru
      _
    // Predicated region
    $region18: #{mlp_state_forward.1} parent=1 // pred_check
      _
    $region19: #{mlp_state_forward.1} parent=1 // pred_check_branch
      %33 = sbr.rel (0) target = $region21
    $region20: #{mlp_state_forward.1} parent=1 // pred_region
      _
    $region21: #{mlp_state_forward.1} parent=1 // pred_fallthru
      _
    // Predicated region
    $region22: #{mlp_state_forward.1} parent=1 // pred_check
      _
    $region23: #{mlp_state_forward.1} parent=1 // pred_check_branch
      %35 = sbr.rel (0) target = $region25
    $region24: #{mlp_state_forward.1} parent=1 // pred_region
      %s37 = ssub.s32 4096, 4096
      %38 = vsyncadd [#allocation5], %s37
      %s39 = sshll.u32 [#allocation4], 4
      %s40 = int_to_ptr.vmem [resolvable:$true] %s39
      %45 = dma.hbm_to_vmem [thread:$0]  %s5, 4096, %s40, [#allocation5], 64, 64, 4
    $region25: #{mlp_state_forward.1} parent=1 // pred_fallthru
      _
    // Predicated region
    $region26: #{mlp_state_forward.1} parent=1 // pred_check
      _
    $region27: #{mlp_state_forward.1} parent=1 // pred_check_branch
      %47 = sbr.rel (0) target = $region29
    $region28: #{mlp_state_forward.1} parent=1 // pred_region
      _
    $region29: #{mlp_state_forward.1} parent=1 // pred_fallthru
      _
    // Predicated region
    $region30: #{mlp_state_forward.1} parent=1 // pred_check
      _
    $region31: #{mlp_state_forward.1} parent=1 // pred_check_branch
      %49 = sbr.rel (0) target = $region33
    $region32: #{mlp_state_forward.1} parent=1 // pred_region
      %50 = dma.done [#allocation3], 16384
    $region33: #{mlp_state_forward.1} parent=1 // pred_fallthru
      _
    // Predicated region
    $region34: #{mlp_state_forward.1} parent=1 // pred_check
      _
    $region35: #{mlp_state_forward.1} parent=1 // pred_check_branch
      %52 = sbr.rel (0) target = $region37
    $region36: #{mlp_state_forward.1} parent=1 // pred_region
      %53 = dma.done [#allocation5], 4096
    $region37: #{mlp_state_forward.1} parent=1 // pred_fallthru
      _
    %v55 = vld [vmem:[%s0] sm:$0xff]
    %v56 = vld [vmem:[%s0 + $0x8] sm:$0xff]
    %v57 = vld [vmem:[%s1] sm:$0xff]
    %v58 = vld [vmem:[%s2] sm:$0xf]
    %60 = vset.pattern.permute.xlu0 0
    %61 = vperm.xlu0 %60, %v55
    %v62 = vpop.permute.xlu0 %61
    %65 = vset.pattern.permute.xlu0 0
    %66 = vperm.xlu0 %65, %v56
    %v67 = vpop.permute.xlu0 %66
    %v70 = vlaneseq
    %v71 = vshrl.u32 %v70, 7
    %v72 = vsub.s32 0, %v71
    %v73 = vrot.slane %v57, %v72
    %v74 = vlaneseq
    %v75 = vshrl.u32 %v74, 7
    %v76 = vsub.s32 2, %v75
    %v77 = vrot.slane %v57, %v76
    %v78 = vlaneseq
    %v79 = vshrl.u32 %v78, 7
    %v80 = vsub.s32 4, %v79
    %v81 = vrot.slane %v57, %v80
    %v82 = vlaneseq
    %v83 = vshrl.u32 %v82, 7
    %v84 = vsub.s32 6, %v83
    %v85 = vrot.slane %v57, %v84
    %v90 = vlaneseq
    %v91 = vshrl.u32 %v90, 7
    %v92 = vsub.s32 0, %v91
    %v93 = vrot.slane %v73, %v92
    %v94 = vlaneseq
    %v95 = vshrl.u32 %v94, 7
    %v96 = vsub.s32 0, %v95
    %v97 = vrot.slane %v77, %v96
    %v98 = vlaneseq
    %v99 = vshrl.u32 %v98, 7
    %v100 = vsub.s32 0, %v99
    %v101 = vrot.slane %v81, %v100
    %v102 = vlaneseq
    %v103 = vshrl.u32 %v102, 7
    %v104 = vsub.s32 0, %v103
    %v105 = vrot.slane %v85, %v104
    %v106 = vmul.f32 %v62, %v93
    %v107 = vmul.f32 %v62, %v97
    %v108 = vmul.f32 %v62, %v101
    %v109 = vmul.f32 %v62, %v105
    %v110 = vmul.f32 %v67, %v93
    %v111 = vmul.f32 %v67, %v97
    %v112 = vmul.f32 %v67, %v101
    %v113 = vmul.f32 %v67, %v105
    %v115 = vlaneseq
    %v116 = vshrl.u32 %v115, 7
    %v117 = vsub.s32 0, %v116
    %v118 = vrot.slane %v58, %v117
    %v119 = vlaneseq
    %v120 = vshrl.u32 %v119, 7
    %v121 = vsub.s32 1, %v120
    %v122 = vrot.slane %v58, %v121
    %v123 = vlaneseq
    %v124 = vshrl.u32 %v123, 7
    %v125 = vsub.s32 2, %v124
    %v126 = vrot.slane %v58, %v125
    %v127 = vlaneseq
    %v128 = vshrl.u32 %v127, 7
    %v129 = vsub.s32 3, %v128
    %v130 = vrot.slane %v58, %v129
    %v135 = vadd.f32 %v118, %v106
    %v136 = vadd.f32 %v122, %v107
    %v137 = vadd.f32 %v126, %v108
    %v138 = vadd.f32 %v130, %v109
    %v139 = vadd.f32 %v118, %v110
    %v140 = vadd.f32 %v122, %v111
    %v141 = vadd.f32 %v126, %v112
    %v142 = vadd.f32 %v130, %v113
    %143 = vset.pattern.permute.xlu0 1
    %144 = vperm.xlu0 %143, %v55
    %v145 = vpop.permute.xlu0 %144
    %147 = vset.pattern.permute.xlu0 1
    %148 = vperm.xlu0 %147, %v56
    %v149 = vpop.permute.xlu0 %148
    %v151 = vlaneseq
    %v152 = vshrl.u32 %v151, 7
    %v153 = vsub.s32 1, %v152
    %v154 = vrot.slane %v57, %v153
    %v155 = vlaneseq
    %v156 = vshrl.u32 %v155, 7
    %v157 = vsub.s32 3, %v156
    %v158 = vrot.slane %v57, %v157
    %v159 = vlaneseq
    %v160 = vshrl.u32 %v159, 7
    %v161 = vsub.s32 5, %v160
    %v162 = vrot.slane %v57, %v161
    %v163 = vlaneseq
    %v164 = vshrl.u32 %v163, 7
    %v165 = vsub.s32 7, %v164
    %v166 = vrot.slane %v57, %v165
    %v171 = vlaneseq
    %v172 = vshrl.u32 %v171, 7
    %v173 = vsub.s32 1, %v172
    %v174 = vrot.slane %v154, %v173
    %v175 = vlaneseq
    %v176 = vshrl.u32 %v175, 7
    %v177 = vsub.s32 1, %v176
    %v178 = vrot.slane %v158, %v177
    %v179 = vlaneseq
    %v180 = vshrl.u32 %v179, 7
    %v181 = vsub.s32 1, %v180
    %v182 = vrot.slane %v162, %v181
    %v183 = vlaneseq
    %v184 = vshrl.u32 %v183, 7
    %v185 = vsub.s32 1, %v184
    %v186 = vrot.slane %v166, %v185
    %v187 = vmul.f32 %v145, %v174
    %v188 = vmul.f32 %v145, %v178
    %v189 = vmul.f32 %v145, %v182
    %v190 = vmul.f32 %v145, %v186
    %v191 = vmul.f32 %v149, %v174
    %v192 = vmul.f32 %v149, %v178
    %v193 = vmul.f32 %v149, %v182
    %v194 = vmul.f32 %v149, %v186
    %v195 = vadd.f32 %v135, %v187
    %v196 = vadd.f32 %v136, %v188
    %v197 = vadd.f32 %v137, %v189
    %v198 = vadd.f32 %v138, %v190
    %v199 = vadd.f32 %v139, %v191
    %v200 = vadd.f32 %v140, %v192
    %v201 = vadd.f32 %v141, %v193
    %v202 = vadd.f32 %v142, %v194
    %v203 = vmax.f32 %v195, 0.0
    %v204 = vmax.f32 %v196, 0.0
    %v205 = vmax.f32 %v197, 0.0
    %v206 = vmax.f32 %v198, 0.0
    %v207 = vmax.f32 %v199, 0.0
    %v208 = vmax.f32 %v200, 0.0
    %v209 = vmax.f32 %v201, 0.0
    %v210 = vmax.f32 %v202, 0.0
    %v211 = vpack.c.bf16 %v207, %v203
    %v212 = vpack.c.bf16 %v208, %v204
    %v213 = vpack.c.bf16 %v209, %v205
    %v214 = vpack.c.bf16 %v210, %v206
    %v215 = vld [vmem:[#allocation2] sm:$0xff]
    %v216 = vld [vmem:[#allocation2 + $0x8] sm:$0xff]
    %v217 = vld [vmem:[#allocation2 + $0x10] sm:$0xff]
    %v218 = vld [vmem:[#allocation2 + $0x18] sm:$0xff]
    %v219 = vld [vmem:[#allocation2 + $0x20] sm:$0xff]
    %v220 = vld [vmem:[#allocation2 + $0x28] sm:$0xff]
    %v221 = vld [vmem:[#allocation2 + $0x30] sm:$0xff]
    %v222 = vld [vmem:[#allocation2 + $0x38] sm:$0xff]
    %v223 = vld [vmem:[#allocation2 + $0x40] sm:$0xff]
    %v224 = vld [vmem:[#allocation2 + $0x48] sm:$0xff]
    %v225 = vld [vmem:[#allocation2 + $0x50] sm:$0xff]
    %v226 = vld [vmem:[#allocation2 + $0x58] sm:$0xff]
    %v227 = vld [vmem:[#allocation2 + $0x60] sm:$0xff]
    %v228 = vld [vmem:[#allocation2 + $0x68] sm:$0xff]
    %v229 = vld [vmem:[#allocation2 + $0x70] sm:$0xff]
    %v230 = vld [vmem:[#allocation2 + $0x78] sm:$0xff]
    %v231 = vld [vmem:[#allocation2 + $0x80] sm:$0xff]
    %v232 = vld [vmem:[#allocation2 + $0x88] sm:$0xff]
    %v233 = vld [vmem:[#allocation2 + $0x90] sm:$0xff]
    %v234 = vld [vmem:[#allocation2 + $0x98] sm:$0xff]
    %v235 = vld [vmem:[#allocation2 + $0xa0] sm:$0xff]
    %v236 = vld [vmem:[#allocation2 + $0xa8] sm:$0xff]
    %v237 = vld [vmem:[#allocation2 + $0xb0] sm:$0xff]
    %v238 = vld [vmem:[#allocation2 + $0xb8] sm:$0xff]
    %v239 = vld [vmem:[#allocation2 + $0xc0] sm:$0xff]
    %v240 = vld [vmem:[#allocation2 + $0xc8] sm:$0xff]
    %v241 = vld [vmem:[#allocation2 + $0xd0] sm:$0xff]
    %v242 = vld [vmem:[#allocation2 + $0xd8] sm:$0xff]
    %v243 = vld [vmem:[#allocation2 + $0xe0] sm:$0xff]
    %v244 = vld [vmem:[#allocation2 + $0xe8] sm:$0xff]
    %v245 = vld [vmem:[#allocation2 + $0xf0] sm:$0xff]
    %v246 = vld [vmem:[#allocation2 + $0xf8] sm:$0xff]
    %v247 = vld [vmem:[#allocation2 + $0x100] sm:$0xff]
    %v248 = vld [vmem:[#allocation2 + $0x108] sm:$0xff]
    %v249 = vld [vmem:[#allocation2 + $0x110] sm:$0xff]
    %v250 = vld [vmem:[#allocation2 + $0x118] sm:$0xff]
    %v251 = vld [vmem:[#allocation2 + $0x120] sm:$0xff]
    %v252 = vld [vmem:[#allocation2 + $0x128] sm:$0xff]
    %v253 = vld [vmem:[#allocation2 + $0x130] sm:$0xff]
    %v254 = vld [vmem:[#allocation2 + $0x138] sm:$0xff]
    %v255 = vld [vmem:[#allocation2 + $0x140] sm:$0xff]
    %v256 = vld [vmem:[#allocation2 + $0x148] sm:$0xff]
    %v257 = vld [vmem:[#allocation2 + $0x150] sm:$0xff]
    %v258 = vld [vmem:[#allocation2 + $0x158] sm:$0xff]
    %v259 = vld [vmem:[#allocation2 + $0x160] sm:$0xff]
    %v260 = vld [vmem:[#allocation2 + $0x168] sm:$0xff]
    %v261 = vld [vmem:[#allocation2 + $0x170] sm:$0xff]
    %v262 = vld [vmem:[#allocation2 + $0x178] sm:$0xff]
    %v263 = vld [vmem:[#allocation2 + $0x180] sm:$0xff]
    %v264 = vld [vmem:[#allocation2 + $0x188] sm:$0xff]
    %v265 = vld [vmem:[#allocation2 + $0x190] sm:$0xff]
    %v266 = vld [vmem:[#allocation2 + $0x198] sm:$0xff]
    %v267 = vld [vmem:[#allocation2 + $0x1a0] sm:$0xff]
    %v268 = vld [vmem:[#allocation2 + $0x1a8] sm:$0xff]
    %v269 = vld [vmem:[#allocation2 + $0x1b0] sm:$0xff]
    %v270 = vld [vmem:[#allocation2 + $0x1b8] sm:$0xff]
    %v271 = vld [vmem:[#allocation2 + $0x1c0] sm:$0xff]
    %v272 = vld [vmem:[#allocation2 + $0x1c8] sm:$0xff]
    %v273 = vld [vmem:[#allocation2 + $0x1d0] sm:$0xff]
    %v274 = vld [vmem:[#allocation2 + $0x1d8] sm:$0xff]
    %v275 = vld [vmem:[#allocation2 + $0x1e0] sm:$0xff]
    %v276 = vld [vmem:[#allocation2 + $0x1e8] sm:$0xff]
    %v277 = vld [vmem:[#allocation2 + $0x1f0] sm:$0xff]
    %v278 = vld [vmem:[#allocation2 + $0x1f8] sm:$0xff]
    %v279 = vld [vmem:[#allocation2 + $0x200] sm:$0xff]
    %v280 = vld [vmem:[#allocation2 + $0x208] sm:$0xff]
    %v281 = vld [vmem:[#allocation2 + $0x210] sm:$0xff]
    %v282 = vld [vmem:[#allocation2 + $0x218] sm:$0xff]
    %v283 = vld [vmem:[#allocation2 + $0x220] sm:$0xff]
    %v284 = vld [vmem:[#allocation2 + $0x228] sm:$0xff]
    %v285 = vld [vmem:[#allocation2 + $0x230] sm:$0xff]
    %v286 = vld [vmem:[#allocation2 + $0x238] sm:$0xff]
    %v287 = vld [vmem:[#allocation2 + $0x240] sm:$0xff]
    %v288 = vld [vmem:[#allocation2 + $0x248] sm:$0xff]
    %v289 = vld [vmem:[#allocation2 + $0x250] sm:$0xff]
    %v290 = vld [vmem:[#allocation2 + $0x258] sm:$0xff]
    %v291 = vld [vmem:[#allocation2 + $0x260] sm:$0xff]
    %v292 = vld [vmem:[#allocation2 + $0x268] sm:$0xff]
    %v293 = vld [vmem:[#allocation2 + $0x270] sm:$0xff]
    %v294 = vld [vmem:[#allocation2 + $0x278] sm:$0xff]
    %v295 = vld [vmem:[#allocation2 + $0x280] sm:$0xff]
    %v296 = vld [vmem:[#allocation2 + $0x288] sm:$0xff]
    %v297 = vld [vmem:[#allocation2 + $0x290] sm:$0xff]
    %v298 = vld [vmem:[#allocation2 + $0x298] sm:$0xff]
    %v299 = vld [vmem:[#allocation2 + $0x2a0] sm:$0xff]
    %v300 = vld [vmem:[#allocation2 + $0x2a8] sm:$0xff]
    %v301 = vld [vmem:[#allocation2 + $0x2b0] sm:$0xff]
    %v302 = vld [vmem:[#allocation2 + $0x2b8] sm:$0xff]
    %v303 = vld [vmem:[#allocation2 + $0x2c0] sm:$0xff]
    %v304 = vld [vmem:[#allocation2 + $0x2c8] sm:$0xff]
    %v305 = vld [vmem:[#allocation2 + $0x2d0] sm:$0xff]
    %v306 = vld [vmem:[#allocation2 + $0x2d8] sm:$0xff]
    %v307 = vld [vmem:[#allocation2 + $0x2e0] sm:$0xff]
    %v308 = vld [vmem:[#allocation2 + $0x2e8] sm:$0xff]
    %v309 = vld [vmem:[#allocation2 + $0x2f0] sm:$0xff]
    %v310 = vld [vmem:[#allocation2 + $0x2f8] sm:$0xff]
    %v311 = vld [vmem:[#allocation2 + $0x300] sm:$0xff]
    %v312 = vld [vmem:[#allocation2 + $0x308] sm:$0xff]
    %v313 = vld [vmem:[#allocation2 + $0x310] sm:$0xff]
    %v314 = vld [vmem:[#allocation2 + $0x318] sm:$0xff]
    %v315 = vld [vmem:[#allocation2 + $0x320] sm:$0xff]
    %v316 = vld [vmem:[#allocation2 + $0x328] sm:$0xff]
    %v317 = vld [vmem:[#allocation2 + $0x330] sm:$0xff]
    %v318 = vld [vmem:[#allocation2 + $0x338] sm:$0xff]
    %v319 = vld [vmem:[#allocation2 + $0x340] sm:$0xff]
    %v320 = vld [vmem:[#allocation2 + $0x348] sm:$0xff]
    %v321 = vld [vmem:[#allocation2 + $0x350] sm:$0xff]
    %v322 = vld [vmem:[#allocation2 + $0x358] sm:$0xff]
    %v323 = vld [vmem:[#allocation2 + $0x360] sm:$0xff]
    %v324 = vld [vmem:[#allocation2 + $0x368] sm:$0xff]
    %v325 = vld [vmem:[#allocation2 + $0x370] sm:$0xff]
    %v326 = vld [vmem:[#allocation2 + $0x378] sm:$0xff]
    %v327 = vld [vmem:[#allocation2 + $0x380] sm:$0xff]
    %v328 = vld [vmem:[#allocation2 + $0x388] sm:$0xff]
    %v329 = vld [vmem:[#allocation2 + $0x390] sm:$0xff]
    %v330 = vld [vmem:[#allocation2 + $0x398] sm:$0xff]
    %v331 = vld [vmem:[#allocation2 + $0x3a0] sm:$0xff]
    %v332 = vld [vmem:[#allocation2 + $0x3a8] sm:$0xff]
    %v333 = vld [vmem:[#allocation2 + $0x3b0] sm:$0xff]
    %v334 = vld [vmem:[#allocation2 + $0x3b8] sm:$0xff]
    %v335 = vld [vmem:[#allocation2 + $0x3c0] sm:$0xff]
    %v336 = vld [vmem:[#allocation2 + $0x3c8] sm:$0xff]
    %v337 = vld [vmem:[#allocation2 + $0x3d0] sm:$0xff]
    %v338 = vld [vmem:[#allocation2 + $0x3d8] sm:$0xff]
    %v339 = vld [vmem:[#allocation2 + $0x3e0] sm:$0xff]
    %v340 = vld [vmem:[#allocation2 + $0x3e8] sm:$0xff]
    %v341 = vld [vmem:[#allocation2 + $0x3f0] sm:$0xff]
    %v342 = vld [vmem:[#allocation2 + $0x3f8] sm:$0xff]
    %v343 = vld [vmem:[%s4] sm:$0xf]
    %v345 = vlaneseq
    %v346 = vshrl.u32 %v345, 7
    %v347 = vsub.s32 0, %v346
    %v348 = vrot.slane %v343, %v347
    %v349 = vlaneseq
    %v350 = vshrl.u32 %v349, 7
    %v351 = vsub.s32 1, %v350
    %v352 = vrot.slane %v343, %v351
    %v353 = vlaneseq
    %v354 = vshrl.u32 %v353, 7
    %v355 = vsub.s32 2, %v354
    %v356 = vrot.slane %v343, %v355
    %v357 = vlaneseq
    %v358 = vshrl.u32 %v357, 7
    %v359 = vsub.s32 3, %v358
    %v360 = vrot.slane %v343, %v359
    %v493 = vunpack.c.l.b16 %v215
    %v494 = vunpack.c.h.b16 %v215
    %v495 = vunpack.c.l.b16 %v216
    %v496 = vunpack.c.h.b16 %v216
    %v497 = vunpack.c.l.b16 %v217
    %v498 = vunpack.c.h.b16 %v217
    %v499 = vunpack.c.l.b16 %v218
    %v500 = vunpack.c.h.b16 %v218
    %v501 = vunpack.c.l.b16 %v219
    %v502 = vunpack.c.h.b16 %v219
    %v503 = vunpack.c.l.b16 %v220
    %v504 = vunpack.c.h.b16 %v220
    %v505 = vunpack.c.l.b16 %v221
    %v506 = vunpack.c.h.b16 %v221
    %v507 = vunpack.c.l.b16 %v222
    %v508 = vunpack.c.h.b16 %v222
    %v509 = vunpack.c.l.b16 %v223
    %v510 = vunpack.c.h.b16 %v223
    %v511 = vunpack.c.l.b16 %v224
    %v512 = vunpack.c.h.b16 %v224
    %v513 = vunpack.c.l.b16 %v225
    %v514 = vunpack.c.h.b16 %v225
    %v515 = vunpack.c.l.b16 %v226
    %v516 = vunpack.c.h.b16 %v226
    %v517 = vunpack.c.l.b16 %v227
    %v518 = vunpack.c.h.b16 %v227
    %v519 = vunpack.c.l.b16 %v228
    %v520 = vunpack.c.h.b16 %v228
    %v521 = vunpack.c.l.b16 %v229
    %v522 = vunpack.c.h.b16 %v229
    %v523 = vunpack.c.l.b16 %v230
    %v524 = vunpack.c.h.b16 %v230
    %v525 = vunpack.c.l.b16 %v231
    %v526 = vunpack.c.h.b16 %v231
    %v527 = vunpack.c.l.b16 %v232
    %v528 = vunpack.c.h.b16 %v232
    %v529 = vunpack.c.l.b16 %v233
    %v530 = vunpack.c.h.b16 %v233
    %v531 = vunpack.c.l.b16 %v234
    %v532 = vunpack.c.h.b16 %v234
    %v533 = vunpack.c.l.b16 %v235
    %v534 = vunpack.c.h.b16 %v235
    %v535 = vunpack.c.l.b16 %v236
    %v536 = vunpack.c.h.b16 %v236
    %v537 = vunpack.c.l.b16 %v237
    %v538 = vunpack.c.h.b16 %v237
    %v539 = vunpack.c.l.b16 %v238
    %v540 = vunpack.c.h.b16 %v238
    %v541 = vunpack.c.l.b16 %v239
    %v542 = vunpack.c.h.b16 %v239
    %v543 = vunpack.c.l.b16 %v240
    %v544 = vunpack.c.h.b16 %v240
    %v545 = vunpack.c.l.b16 %v241
    %v546 = vunpack.c.h.b16 %v241
    %v547 = vunpack.c.l.b16 %v242
    %v548 = vunpack.c.h.b16 %v242
    %v549 = vunpack.c.l.b16 %v243
    %v550 = vunpack.c.h.b16 %v243
    %v551 = vunpack.c.l.b16 %v244
    %v552 = vunpack.c.h.b16 %v244
    %v553 = vunpack.c.l.b16 %v245
    %v554 = vunpack.c.h.b16 %v245
    %v555 = vunpack.c.l.b16 %v246
    %v556 = vunpack.c.h.b16 %v246
    %v557 = vunpack.c.l.b16 %v247
    %v558 = vunpack.c.h.b16 %v247
    %v559 = vunpack.c.l.b16 %v248
    %v560 = vunpack.c.h.b16 %v248
    %v561 = vunpack.c.l.b16 %v249
    %v562 = vunpack.c.h.b16 %v249
    %v563 = vunpack.c.l.b16 %v250
    %v564 = vunpack.c.h.b16 %v250
    %v565 = vunpack.c.l.b16 %v251
    %v566 = vunpack.c.h.b16 %v251
    %v567 = vunpack.c.l.b16 %v252
    %v568 = vunpack.c.h.b16 %v252
    %v569 = vunpack.c.l.b16 %v253
    %v570 = vunpack.c.h.b16 %v253
    %v571 = vunpack.c.l.b16 %v254
    %v572 = vunpack.c.h.b16 %v254
    %v573 = vunpack.c.l.b16 %v255
    %v574 = vunpack.c.h.b16 %v255
    %v575 = vunpack.c.l.b16 %v256
    %v576 = vunpack.c.h.b16 %v256
    %v577 = vunpack.c.l.b16 %v257
    %v578 = vunpack.c.h.b16 %v257
    %v579 = vunpack.c.l.b16 %v258
    %v580 = vunpack.c.h.b16 %v258
    %v581 = vunpack.c.l.b16 %v259
    %v582 = vunpack.c.h.b16 %v259
    %v583 = vunpack.c.l.b16 %v260
    %v584 = vunpack.c.h.b16 %v260
    %v585 = vunpack.c.l.b16 %v261
    %v586 = vunpack.c.h.b16 %v261
    %v587 = vunpack.c.l.b16 %v262
    %v588 = vunpack.c.h.b16 %v262
    %v589 = vunpack.c.l.b16 %v263
    %v590 = vunpack.c.h.b16 %v263
    %v591 = vunpack.c.l.b16 %v264
    %v592 = vunpack.c.h.b16 %v264
    %v593 = vunpack.c.l.b16 %v265
    %v594 = vunpack.c.h.b16 %v265
    %v595 = vunpack.c.l.b16 %v266
    %v596 = vunpack.c.h.b16 %v266
    %v597 = vunpack.c.l.b16 %v267
    %v598 = vunpack.c.h.b16 %v267
    %v599 = vunpack.c.l.b16 %v268
    %v600 = vunpack.c.h.b16 %v268
    %v601 = vunpack.c.l.b16 %v269
    %v602 = vunpack.c.h.b16 %v269
    %v603 = vunpack.c.l.b16 %v270
    %v604 = vunpack.c.h.b16 %v270
    %v605 = vunpack.c.l.b16 %v271
    %v606 = vunpack.c.h.b16 %v271
    %v607 = vunpack.c.l.b16 %v272
    %v608 = vunpack.c.h.b16 %v272
    %v609 = vunpack.c.l.b16 %v273
    %v610 = vunpack.c.h.b16 %v273
    %v611 = vunpack.c.l.b16 %v274
    %v612 = vunpack.c.h.b16 %v274
    %v613 = vunpack.c.l.b16 %v275
    %v614 = vunpack.c.h.b16 %v275
    %v615 = vunpack.c.l.b16 %v276
    %v616 = vunpack.c.h.b16 %v276
    %v617 = vunpack.c.l.b16 %v277
    %v618 = vunpack.c.h.b16 %v277
    %v619 = vunpack.c.l.b16 %v278
    %v620 = vunpack.c.h.b16 %v278
    %v621 = vunpack.c.l.b16 %v279
    %v622 = vunpack.c.h.b16 %v279
    %v623 = vunpack.c.l.b16 %v280
    %v624 = vunpack.c.h.b16 %v280
    %v625 = vunpack.c.l.b16 %v281
    %v626 = vunpack.c.h.b16 %v281
    %v627 = vunpack.c.l.b16 %v282
    %v628 = vunpack.c.h.b16 %v282
    %v629 = vunpack.c.l.b16 %v283
    %v630 = vunpack.c.h.b16 %v283
    %v631 = vunpack.c.l.b16 %v284
    %v632 = vunpack.c.h.b16 %v284
    %v633 = vunpack.c.l.b16 %v285
    %v634 = vunpack.c.h.b16 %v285
    %v635 = vunpack.c.l.b16 %v286
    %v636 = vunpack.c.h.b16 %v286
    %v637 = vunpack.c.l.b16 %v287
    %v638 = vunpack.c.h.b16 %v287
    %v639 = vunpack.c.l.b16 %v288
    %v640 = vunpack.c.h.b16 %v288
    %v641 = vunpack.c.l.b16 %v289
    %v642 = vunpack.c.h.b16 %v289
    %v643 = vunpack.c.l.b16 %v290
    %v644 = vunpack.c.h.b16 %v290
    %v645 = vunpack.c.l.b16 %v291
    %v646 = vunpack.c.h.b16 %v291
    %v647 = vunpack.c.l.b16 %v292
    %v648 = vunpack.c.h.b16 %v292
    %v649 = vunpack.c.l.b16 %v293
    %v650 = vunpack.c.h.b16 %v293
    %v651 = vunpack.c.l.b16 %v294
    %v652 = vunpack.c.h.b16 %v294
    %v653 = vunpack.c.l.b16 %v295
    %v654 = vunpack.c.h.b16 %v295
    %v655 = vunpack.c.l.b16 %v296
    %v656 = vunpack.c.h.b16 %v296
    %v657 = vunpack.c.l.b16 %v297
    %v658 = vunpack.c.h.b16 %v297
    %v659 = vunpack.c.l.b16 %v298
    %v660 = vunpack.c.h.b16 %v298
    %v661 = vunpack.c.l.b16 %v299
    %v662 = vunpack.c.h.b16 %v299
    %v663 = vunpack.c.l.b16 %v300
    %v664 = vunpack.c.h.b16 %v300
    %v665 = vunpack.c.l.b16 %v301
    %v666 = vunpack.c.h.b16 %v301
    %v667 = vunpack.c.l.b16 %v302
    %v668 = vunpack.c.h.b16 %v302
    %v669 = vunpack.c.l.b16 %v303
    %v670 = vunpack.c.h.b16 %v303
    %v671 = vunpack.c.l.b16 %v304
    %v672 = vunpack.c.h.b16 %v304
    %v673 = vunpack.c.l.b16 %v305
    %v674 = vunpack.c.h.b16 %v305
    %v675 = vunpack.c.l.b16 %v306
    %v676 = vunpack.c.h.b16 %v306
    %v677 = vunpack.c.l.b16 %v307
    %v678 = vunpack.c.h.b16 %v307
    %v679 = vunpack.c.l.b16 %v308
    %v680 = vunpack.c.h.b16 %v308
    %v681 = vunpack.c.l.b16 %v309
    %v682 = vunpack.c.h.b16 %v309
    %v683 = vunpack.c.l.b16 %v310
    %v684 = vunpack.c.h.b16 %v310
    %v685 = vunpack.c.l.b16 %v311
    %v686 = vunpack.c.h.b16 %v311
    %v687 = vunpack.c.l.b16 %v312
    %v688 = vunpack.c.h.b16 %v312
    %v689 = vunpack.c.l.b16 %v313
    %v690 = vunpack.c.h.b16 %v313
    %v691 = vunpack.c.l.b16 %v314
    %v692 = vunpack.c.h.b16 %v314
    %v693 = vunpack.c.l.b16 %v315
    %v694 = vunpack.c.h.b16 %v315
    %v695 = vunpack.c.l.b16 %v316
    %v696 = vunpack.c.h.b16 %v316
    %v697 = vunpack.c.l.b16 %v317
    %v698 = vunpack.c.h.b16 %v317
    %v699 = vunpack.c.l.b16 %v318
    %v700 = vunpack.c.h.b16 %v318
    %v701 = vunpack.c.l.b16 %v319
    %v702 = vunpack.c.h.b16 %v319
    %v703 = vunpack.c.l.b16 %v320
    %v704 = vunpack.c.h.b16 %v320
    %v705 = vunpack.c.l.b16 %v321
    %v706 = vunpack.c.h.b16 %v321
    %v707 = vunpack.c.l.b16 %v322
    %v708 = vunpack.c.h.b16 %v322
    %v709 = vunpack.c.l.b16 %v323
    %v710 = vunpack.c.h.b16 %v323
    %v711 = vunpack.c.l.b16 %v324
    %v712 = vunpack.c.h.b16 %v324
    %v713 = vunpack.c.l.b16 %v325
    %v714 = vunpack.c.h.b16 %v325
    %v715 = vunpack.c.l.b16 %v326
    %v716 = vunpack.c.h.b16 %v326
    %v717 = vunpack.c.l.b16 %v327
    %v718 = vunpack.c.h.b16 %v327
    %v719 = vunpack.c.l.b16 %v328
    %v720 = vunpack.c.h.b16 %v328
    %v721 = vunpack.c.l.b16 %v329
    %v722 = vunpack.c.h.b16 %v329
    %v723 = vunpack.c.l.b16 %v330
    %v724 = vunpack.c.h.b16 %v330
    %v725 = vunpack.c.l.b16 %v331
    %v726 = vunpack.c.h.b16 %v331
    %v727 = vunpack.c.l.b16 %v332
    %v728 = vunpack.c.h.b16 %v332
    %v729 = vunpack.c.l.b16 %v333
    %v730 = vunpack.c.h.b16 %v333
    %v731 = vunpack.c.l.b16 %v334
    %v732 = vunpack.c.h.b16 %v334
    %v733 = vunpack.c.l.b16 %v335
    %v734 = vunpack.c.h.b16 %v335
    %v735 = vunpack.c.l.b16 %v336
    %v736 = vunpack.c.h.b16 %v336
    %v737 = vunpack.c.l.b16 %v337
    %v738 = vunpack.c.h.b16 %v337
    %v739 = vunpack.c.l.b16 %v338
    %v740 = vunpack.c.h.b16 %v338
    %v741 = vunpack.c.l.b16 %v339
    %v742 = vunpack.c.h.b16 %v339
    %v743 = vunpack.c.l.b16 %v340
    %v744 = vunpack.c.h.b16 %v340
    %v745 = vunpack.c.l.b16 %v341
    %v746 = vunpack.c.h.b16 %v341
    %v747 = vunpack.c.l.b16 %v342
    %v748 = vunpack.c.h.b16 %v342
    %v749 = vpack.c.b16 %v497, %v493
    %v750 = vpack.c.b16 %v498, %v494
    %v751 = vpack.c.b16 %v499, %v495
    %v752 = vpack.c.b16 %v500, %v496
    %v753 = vpack.c.b16 %v505, %v501
    %v754 = vpack.c.b16 %v506, %v502
    %v755 = vpack.c.b16 %v507, %v503
    %v756 = vpack.c.b16 %v508, %v504
    %v757 = vpack.c.b16 %v513, %v509
    %v758 = vpack.c.b16 %v514, %v510
    %v759 = vpack.c.b16 %v515, %v511
    %v760 = vpack.c.b16 %v516, %v512
    %v761 = vpack.c.b16 %v521, %v517
    %v762 = vpack.c.b16 %v522, %v518
    %v763 = vpack.c.b16 %v523, %v519
    %v764 = vpack.c.b16 %v524, %v520
    %v765 = vpack.c.b16 %v529, %v525
    %v766 = vpack.c.b16 %v530, %v526
    %v767 = vpack.c.b16 %v531, %v527
    %v768 = vpack.c.b16 %v532, %v528
    %v769 = vpack.c.b16 %v537, %v533
    %v770 = vpack.c.b16 %v538, %v534
    %v771 = vpack.c.b16 %v539, %v535
    %v772 = vpack.c.b16 %v540, %v536
    %v773 = vpack.c.b16 %v545, %v541
    %v774 = vpack.c.b16 %v546, %v542
    %v775 = vpack.c.b16 %v547, %v543
    %v776 = vpack.c.b16 %v548, %v544
    %v777 = vpack.c.b16 %v553, %v549
    %v778 = vpack.c.b16 %v554, %v550
    %v779 = vpack.c.b16 %v555, %v551
    %v780 = vpack.c.b16 %v556, %v552
    %v781 = vpack.c.b16 %v561, %v557
    %v782 = vpack.c.b16 %v562, %v558
    %v783 = vpack.c.b16 %v563, %v559
    %v784 = vpack.c.b16 %v564, %v560
    %v785 = vpack.c.b16 %v569, %v565
    %v786 = vpack.c.b16 %v570, %v566
    %v787 = vpack.c.b16 %v571, %v567
    %v788 = vpack.c.b16 %v572, %v568
    %v789 = vpack.c.b16 %v577, %v573
    %v790 = vpack.c.b16 %v578, %v574
    %v791 = vpack.c.b16 %v579, %v575
    %v792 = vpack.c.b16 %v580, %v576
    %v793 = vpack.c.b16 %v585, %v581
    %v794 = vpack.c.b16 %v586, %v582
    %v795 = vpack.c.b16 %v587, %v583
    %v796 = vpack.c.b16 %v588, %v584
    %v797 = vpack.c.b16 %v593, %v589
    %v798 = vpack.c.b16 %v594, %v590
    %v799 = vpack.c.b16 %v595, %v591
    %v800 = vpack.c.b16 %v596, %v592
    %v801 = vpack.c.b16 %v601, %v597
    %v802 = vpack.c.b16 %v602, %v598
    %v803 = vpack.c.b16 %v603, %v599
    %v804 = vpack.c.b16 %v604, %v600
    %v805 = vpack.c.b16 %v609, %v605
    %v806 = vpack.c.b16 %v610, %v606
    %v807 = vpack.c.b16 %v611, %v607
    %v808 = vpack.c.b16 %v612, %v608
    %v809 = vpack.c.b16 %v617, %v613
    %v810 = vpack.c.b16 %v618, %v614
    %v811 = vpack.c.b16 %v619, %v615
    %v812 = vpack.c.b16 %v620, %v616
    %v813 = vpack.c.b16 %v625, %v621
    %v814 = vpack.c.b16 %v626, %v622
    %v815 = vpack.c.b16 %v627, %v623
    %v816 = vpack.c.b16 %v628, %v624
    %v817 = vpack.c.b16 %v633, %v629
    %v818 = vpack.c.b16 %v634, %v630
    %v819 = vpack.c.b16 %v635, %v631
    %v820 = vpack.c.b16 %v636, %v632
    %v821 = vpack.c.b16 %v641, %v637
    %v822 = vpack.c.b16 %v642, %v638
    %v823 = vpack.c.b16 %v643, %v639
    %v824 = vpack.c.b16 %v644, %v640
    %v825 = vpack.c.b16 %v649, %v645
    %v826 = vpack.c.b16 %v650, %v646
    %v827 = vpack.c.b16 %v651, %v647
    %v828 = vpack.c.b16 %v652, %v648
    %v829 = vpack.c.b16 %v657, %v653
    %v830 = vpack.c.b16 %v658, %v654
    %v831 = vpack.c.b16 %v659, %v655
    %v832 = vpack.c.b16 %v660, %v656
    %v833 = vpack.c.b16 %v665, %v661
    %v834 = vpack.c.b16 %v666, %v662
    %v835 = vpack.c.b16 %v667, %v663
    %v836 = vpack.c.b16 %v668, %v664
    %v837 = vpack.c.b16 %v673, %v669
    %v838 = vpack.c.b16 %v674, %v670
    %v839 = vpack.c.b16 %v675, %v671
    %v840 = vpack.c.b16 %v676, %v672
    %v841 = vpack.c.b16 %v681, %v677
    %v842 = vpack.c.b16 %v682, %v678
    %v843 = vpack.c.b16 %v683, %v679
    %v844 = vpack.c.b16 %v684, %v680
    %v845 = vpack.c.b16 %v689, %v685
    %v846 = vpack.c.b16 %v690, %v686
    %v847 = vpack.c.b16 %v691, %v687
    %v848 = vpack.c.b16 %v692, %v688
    %v849 = vpack.c.b16 %v697, %v693
    %v850 = vpack.c.b16 %v698, %v694
    %v851 = vpack.c.b16 %v699, %v695
    %v852 = vpack.c.b16 %v700, %v696
    %v853 = vpack.c.b16 %v705, %v701
    %v854 = vpack.c.b16 %v706, %v702
    %v855 = vpack.c.b16 %v707, %v703
    %v856 = vpack.c.b16 %v708, %v704
    %v857 = vpack.c.b16 %v713, %v709
    %v858 = vpack.c.b16 %v714, %v710
    %v859 = vpack.c.b16 %v715, %v711
    %v860 = vpack.c.b16 %v716, %v712
    %v861 = vpack.c.b16 %v721, %v717
    %v862 = vpack.c.b16 %v722, %v718
    %v863 = vpack.c.b16 %v723, %v719
    %v864 = vpack.c.b16 %v724, %v720
    %v865 = vpack.c.b16 %v729, %v725
    %v866 = vpack.c.b16 %v730, %v726
    %v867 = vpack.c.b16 %v731, %v727
    %v868 = vpack.c.b16 %v732, %v728
    %v869 = vpack.c.b16 %v737, %v733
    %v870 = vpack.c.b16 %v738, %v734
    %v871 = vpack.c.b16 %v739, %v735
    %v872 = vpack.c.b16 %v740, %v736
    %v873 = vpack.c.b16 %v745, %v741
    %v874 = vpack.c.b16 %v746, %v742
    %v875 = vpack.c.b16 %v747, %v743
    %v876 = vpack.c.b16 %v748, %v744
    %1005 = vmatprep.subr.bf16.mxu0 %v750
    %1006 = vmatpush1.bf16.msra.mxu0 %v749
    %1007 = vmatprep.subr.bf16.mxu0 %v754
    %1008 = vmatpush1.bf16.msra.mxu0 %v753
    %1009 = vmatprep.subr.bf16.mxu0 %v758
    %1010 = vmatpush1.bf16.msra.mxu0 %v757
    %1011 = vmatprep.subr.bf16.mxu0 %v762
    %1012 = vmatpush1.bf16.msra.mxu0 %v761
    %1013 = vmatprep.subr.bf16.mxu0 %v766
    %1014 = vmatpush1.bf16.msra.mxu0 %v765
    %1015 = vmatprep.subr.bf16.mxu0 %v770
    %1016 = vmatpush1.bf16.msra.mxu0 %v769
    %1017 = vmatprep.subr.bf16.mxu0 %v774
    %1018 = vmatpush1.bf16.msra.mxu0 %v773
    %1019 = vmatprep.subr.bf16.mxu0 %v778
    %1020 = vmatpush1.bf16.msra.mxu0 %v777
    %1021 = vmatprep.subr.bf16.mxu0 %v782
    %1022 = vmatpush1.bf16.msra.mxu0 %v781
    %1023 = vmatprep.subr.bf16.mxu0 %v786
    %1024 = vmatpush1.bf16.msra.mxu0 %v785
    %1025 = vmatprep.subr.bf16.mxu0 %v790
    %1026 = vmatpush1.bf16.msra.mxu0 %v789
    %1027 = vmatprep.subr.bf16.mxu0 %v794
    %1028 = vmatpush1.bf16.msra.mxu0 %v793
    %1029 = vmatprep.subr.bf16.mxu0 %v798
    %1030 = vmatpush1.bf16.msra.mxu0 %v797
    %1031 = vmatprep.subr.bf16.mxu0 %v802
    %1032 = vmatpush1.bf16.msra.mxu0 %v801
    %1033 = vmatprep.subr.bf16.mxu0 %v806
    %1034 = vmatpush1.bf16.msra.mxu0 %v805
    %1035 = vmatprep.subr.bf16.mxu0 %v810
    %1036 = vmatpush1.bf16.msra.mxu0 %v809
    %1037 = vmatprep.mubr.bf16.mxu0 %v212
    %1038 = vmatmul.mubr.bf16.gmra.mrb[0].mxu0 %v211
    %v1039 = vpop.f32.mrb[0].mxu0
    %v1040 = vadd.f32 %v348, %v1039
    %v1041 = vpop.f32.mrb[0].mxu0
    %v1042 = vadd.f32 %v352, %v1041
    %v1043 = vpop.f32.mrb[0].mxu0
    %v1044 = vadd.f32 %v348, %v1043
    %v1045 = vpop.f32.mrb[0].mxu0
    %v1046 = vadd.f32 %v352, %v1045
    %1047 = vdwg.mxu0
    %1048 = vmatprep.subr.bf16.mxu0 %v814
    %1049 = vmatpush1.bf16.msra.mxu0 %v813
    %1050 = vmatprep.subr.bf16.mxu0 %v818
    %1051 = vmatpush1.bf16.msra.mxu0 %v817
    %1052 = vmatprep.subr.bf16.mxu0 %v822
    %1053 = vmatpush1.bf16.msra.mxu0 %v821
    %1054 = vmatprep.subr.bf16.mxu0 %v826
    %1055 = vmatpush1.bf16.msra.mxu0 %v825
    %1056 = vmatprep.subr.bf16.mxu0 %v830
    %1057 = vmatpush1.bf16.msra.mxu0 %v829
    %1058 = vmatprep.subr.bf16.mxu0 %v834
    %1059 = vmatpush1.bf16.msra.mxu0 %v833
    %1060 = vmatprep.subr.bf16.mxu0 %v838
    %1061 = vmatpush1.bf16.msra.mxu0 %v837
    %1062 = vmatprep.subr.bf16.mxu0 %v842
    %1063 = vmatpush1.bf16.msra.mxu0 %v841
    %1064 = vmatprep.subr.bf16.mxu0 %v846
    %1065 = vmatpush1.bf16.msra.mxu0 %v845
    %1066 = vmatprep.subr.bf16.mxu0 %v850
    %1067 = vmatpush1.bf16.msra.mxu0 %v849
    %1068 = vmatprep.subr.bf16.mxu0 %v854
    %1069 = vmatpush1.bf16.msra.mxu0 %v853
    %1070 = vmatprep.subr.bf16.mxu0 %v858
    %1071 = vmatpush1.bf16.msra.mxu0 %v857
    %1072 = vmatprep.subr.bf16.mxu0 %v862
    %1073 = vmatpush1.bf16.msra.mxu0 %v861
    %1074 = vmatprep.subr.bf16.mxu0 %v866
    %1075 = vmatpush1.bf16.msra.mxu0 %v865
    %1076 = vmatprep.subr.bf16.mxu0 %v870
    %1077 = vmatpush1.bf16.msra.mxu0 %v869
    %1078 = vmatprep.subr.bf16.mxu0 %v874
    %1079 = vmatpush1.bf16.msra.mxu0 %v873
    %1080 = vmatprep.mubr.bf16.mxu0 %v214
    %1081 = vmatmul.mubr.bf16.gmra.mrb[0].mxu0 %v213
    %v1082 = vpop.f32.mrb[0].mxu0
    %v1083 = vadd.f32 %v1040, %v1082
    %v1084 = vpop.f32.mrb[0].mxu0
    %v1085 = vadd.f32 %v1042, %v1084
    %v1086 = vpop.f32.mrb[0].mxu0
    %v1087 = vadd.f32 %v1044, %v1086
    %v1088 = vpop.f32.mrb[0].mxu0
    %v1089 = vadd.f32 %v1046, %v1088
    %1090 = vdwg.mxu0
    %1091 = vmatprep.subr.bf16.mxu0 %v752
    %1092 = vmatpush1.bf16.msra.mxu0 %v751
    %1093 = vmatprep.subr.bf16.mxu0 %v756
    %1094 = vmatpush1.bf16.msra.mxu0 %v755
    %1095 = vmatprep.subr.bf16.mxu0 %v760
    %1096 = vmatpush1.bf16.msra.mxu0 %v759
    %1097 = vmatprep.subr.bf16.mxu0 %v764
    %1098 = vmatpush1.bf16.msra.mxu0 %v763
    %1099 = vmatprep.subr.bf16.mxu0 %v768
    %1100 = vmatpush1.bf16.msra.mxu0 %v767
    %1101 = vmatprep.subr.bf16.mxu0 %v772
    %1102 = vmatpush1.bf16.msra.mxu0 %v771
    %1103 = vmatprep.subr.bf16.mxu0 %v776
    %1104 = vmatpush1.bf16.msra.mxu0 %v775
    %1105 = vmatprep.subr.bf16.mxu0 %v780
    %1106 = vmatpush1.bf16.msra.mxu0 %v779
    %1107 = vmatprep.subr.bf16.mxu0 %v784
    %1108 = vmatpush1.bf16.msra.mxu0 %v783
    %1109 = vmatprep.subr.bf16.mxu0 %v788
    %1110 = vmatpush1.bf16.msra.mxu0 %v787
    %1111 = vmatprep.subr.bf16.mxu0 %v792
    %1112 = vmatpush1.bf16.msra.mxu0 %v791
    %1113 = vmatprep.subr.bf16.mxu0 %v796
    %1114 = vmatpush1.bf16.msra.mxu0 %v795
    %1115 = vmatprep.subr.bf16.mxu0 %v800
    %1116 = vmatpush1.bf16.msra.mxu0 %v799
    %1117 = vmatprep.subr.bf16.mxu0 %v804
    %1118 = vmatpush1.bf16.msra.mxu0 %v803
    %1119 = vmatprep.subr.bf16.mxu0 %v808
    %1120 = vmatpush1.bf16.msra.mxu0 %v807
    %1121 = vmatprep.subr.bf16.mxu0 %v812
    %1122 = vmatpush1.bf16.msra.mxu0 %v811
    %1123 = vmatprep.mubr.bf16.mxu0 %v212
    %1124 = vmatmul.mubr.bf16.gmra.mrb[0].mxu0 %v211
    %v1125 = vpop.f32.mrb[0].mxu0
    %v1126 = vadd.f32 %v356, %v1125
    %v1127 = vpop.f32.mrb[0].mxu0
    %v1128 = vadd.f32 %v360, %v1127
    %v1129 = vpop.f32.mrb[0].mxu0
    %v1130 = vadd.f32 %v356, %v1129
    %v1131 = vpop.f32.mrb[0].mxu0
    %v1132 = vadd.f32 %v360, %v1131
    %1133 = vdwg.mxu0
    %1134 = vmatprep.subr.bf16.mxu0 %v816
    %1135 = vmatpush1.bf16.msra.mxu0 %v815
    %1136 = vmatprep.subr.bf16.mxu0 %v820
    %1137 = vmatpush1.bf16.msra.mxu0 %v819
    %1138 = vmatprep.subr.bf16.mxu0 %v824
    %1139 = vmatpush1.bf16.msra.mxu0 %v823
    %1140 = vmatprep.subr.bf16.mxu0 %v828
    %1141 = vmatpush1.bf16.msra.mxu0 %v827
    %1142 = vmatprep.subr.bf16.mxu0 %v832
    %1143 = vmatpush1.bf16.msra.mxu0 %v831
    %1144 = vmatprep.subr.bf16.mxu0 %v836
    %1145 = vmatpush1.bf16.msra.mxu0 %v835
    %1146 = vmatprep.subr.bf16.mxu0 %v840
    %1147 = vmatpush1.bf16.msra.mxu0 %v839
    %1148 = vmatprep.subr.bf16.mxu0 %v844
    %1149 = vmatpush1.bf16.msra.mxu0 %v843
    %1150 = vmatprep.subr.bf16.mxu0 %v848
    %1151 = vmatpush1.bf16.msra.mxu0 %v847
    %1152 = vmatprep.subr.bf16.mxu0 %v852
    %1153 = vmatpush1.bf16.msra.mxu0 %v851
    %1154 = vmatprep.subr.bf16.mxu0 %v856
    %1155 = vmatpush1.bf16.msra.mxu0 %v855
    %1156 = vmatprep.subr.bf16.mxu0 %v860
    %1157 = vmatpush1.bf16.msra.mxu0 %v859
    %1158 = vmatprep.subr.bf16.mxu0 %v864
    %1159 = vmatpush1.bf16.msra.mxu0 %v863
    %1160 = vmatprep.subr.bf16.mxu0 %v868
    %1161 = vmatpush1.bf16.msra.mxu0 %v867
    %1162 = vmatprep.subr.bf16.mxu0 %v872
    %1163 = vmatpush1.bf16.msra.mxu0 %v871
    %1164 = vmatprep.subr.bf16.mxu0 %v876
    %1165 = vmatpush1.bf16.msra.mxu0 %v875
    %1166 = vmatprep.mubr.bf16.mxu0 %v214
    %1167 = vmatmul.mubr.bf16.gmra.mrb[0].mxu0 %v213
    %v1168 = vpop.f32.mrb[0].mxu0
    %v1169 = vadd.f32 %v1126, %v1168
    %v1170 = vpop.f32.mrb[0].mxu0
    %v1171 = vadd.f32 %v1128, %v1170
    %v1172 = vpop.f32.mrb[0].mxu0
    %v1173 = vadd.f32 %v1130, %v1172
    %v1174 = vpop.f32.mrb[0].mxu0
    %v1175 = vadd.f32 %v1132, %v1174
    %1176 = vdwg.mxu0
    %v1177 = vmax.f32 %v1083, 0.0
    %v1178 = vmax.f32 %v1085, 0.0
    %v1179 = vmax.f32 %v1169, 0.0
    %v1180 = vmax.f32 %v1171, 0.0
    %v1181 = vmax.f32 %v1087, 0.0
    %v1182 = vmax.f32 %v1089, 0.0
    %v1183 = vmax.f32 %v1173, 0.0
    %v1184 = vmax.f32 %v1175, 0.0
    %v1185 = vpack.c.bf16 %v1181, %v1177
    %v1186 = vpack.c.bf16 %v1182, %v1178
    %v1187 = vpack.c.bf16 %v1183, %v1179
    %v1188 = vpack.c.bf16 %v1184, %v1180
    %v1189 = vld [vmem:[#allocation4] sm:$0xf]
    %v1190 = vld [vmem:[#allocation4 + $0x4] sm:$0xf]
    %v1191 = vld [vmem:[#allocation4 + $0x8] sm:$0xf]
    %v1192 = vld [vmem:[#allocation4 + $0xc] sm:$0xf]
    %v1193 = vld [vmem:[#allocation4 + $0x10] sm:$0xf]
    %v1194 = vld [vmem:[#allocation4 + $0x14] sm:$0xf]
    %v1195 = vld [vmem:[#allocation4 + $0x18] sm:$0xf]
    %v1196 = vld [vmem:[#allocation4 + $0x1c] sm:$0xf]
    %v1197 = vld [vmem:[#allocation4 + $0x20] sm:$0xf]
    %v1198 = vld [vmem:[#allocation4 + $0x24] sm:$0xf]
    %v1199 = vld [vmem:[#allocation4 + $0x28] sm:$0xf]
    %v1200 = vld [vmem:[#allocation4 + $0x2c] sm:$0xf]
    %v1201 = vld [vmem:[#allocation4 + $0x30] sm:$0xf]
    %v1202 = vld [vmem:[#allocation4 + $0x34] sm:$0xf]
    %v1203 = vld [vmem:[#allocation4 + $0x38] sm:$0xf]
    %v1204 = vld [vmem:[#allocation4 + $0x3c] sm:$0xf]
    %v1205 = vld [vmem:[#allocation4 + $0x40] sm:$0xf]
    %v1206 = vld [vmem:[#allocation4 + $0x44] sm:$0xf]
    %v1207 = vld [vmem:[#allocation4 + $0x48] sm:$0xf]
    %v1208 = vld [vmem:[#allocation4 + $0x4c] sm:$0xf]
    %v1209 = vld [vmem:[#allocation4 + $0x50] sm:$0xf]
    %v1210 = vld [vmem:[#allocation4 + $0x54] sm:$0xf]
    %v1211 = vld [vmem:[#allocation4 + $0x58] sm:$0xf]
    %v1212 = vld [vmem:[#allocation4 + $0x5c] sm:$0xf]
    %v1213 = vld [vmem:[#allocation4 + $0x60] sm:$0xf]
    %v1214 = vld [vmem:[#allocation4 + $0x64] sm:$0xf]
    %v1215 = vld [vmem:[#allocation4 + $0x68] sm:$0xf]
    %v1216 = vld [vmem:[#allocation4 + $0x6c] sm:$0xf]
    %v1217 = vld [vmem:[#allocation4 + $0x70] sm:$0xf]
    %v1218 = vld [vmem:[#allocation4 + $0x74] sm:$0xf]
    %v1219 = vld [vmem:[#allocation4 + $0x78] sm:$0xf]
    %v1220 = vld [vmem:[#allocation4 + $0x7c] sm:$0xf]
    %v1221 = vld [vmem:[#allocation4 + $0x80] sm:$0xf]
    %v1222 = vld [vmem:[#allocation4 + $0x84] sm:$0xf]
    %v1223 = vld [vmem:[#allocation4 + $0x88] sm:$0xf]
    %v1224 = vld [vmem:[#allocation4 + $0x8c] sm:$0xf]
    %v1225 = vld [vmem:[#allocation4 + $0x90] sm:$0xf]
    %v1226 = vld [vmem:[#allocation4 + $0x94] sm:$0xf]
    %v1227 = vld [vmem:[#allocation4 + $0x98] sm:$0xf]
    %v1228 = vld [vmem:[#allocation4 + $0x9c] sm:$0xf]
    %v1229 = vld [vmem:[#allocation4 + $0xa0] sm:$0xf]
    %v1230 = vld [vmem:[#allocation4 + $0xa4] sm:$0xf]
    %v1231 = vld [vmem:[#allocation4 + $0xa8] sm:$0xf]
    %v1232 = vld [vmem:[#allocation4 + $0xac] sm:$0xf]
    %v1233 = vld [vmem:[#allocation4 + $0xb0] sm:$0xf]
    %v1234 = vld [vmem:[#allocation4 + $0xb4] sm:$0xf]
    %v1235 = vld [vmem:[#allocation4 + $0xb8] sm:$0xf]
    %v1236 = vld [vmem:[#allocation4 + $0xbc] sm:$0xf]
    %v1237 = vld [vmem:[#allocation4 + $0xc0] sm:$0xf]
    %v1238 = vld [vmem:[#allocation4 + $0xc4] sm:$0xf]
    %v1239 = vld [vmem:[#allocation4 + $0xc8] sm:$0xf]
    %v1240 = vld [vmem:[#allocation4 + $0xcc] sm:$0xf]
    %v1241 = vld [vmem:[#allocation4 + $0xd0] sm:$0xf]
    %v1242 = vld [vmem:[#allocation4 + $0xd4] sm:$0xf]
    %v1243 = vld [vmem:[#allocation4 + $0xd8] sm:$0xf]
    %v1244 = vld [vmem:[#allocation4 + $0xdc] sm:$0xf]
    %v1245 = vld [vmem:[#allocation4 + $0xe0] sm:$0xf]
    %v1246 = vld [vmem:[#allocation4 + $0xe4] sm:$0xf]
    %v1247 = vld [vmem:[#allocation4 + $0xe8] sm:$0xf]
    %v1248 = vld [vmem:[#allocation4 + $0xec] sm:$0xf]
    %v1249 = vld [vmem:[#allocation4 + $0xf0] sm:$0xf]
    %v1250 = vld [vmem:[#allocation4 + $0xf4] sm:$0xf]
    %v1251 = vld [vmem:[#allocation4 + $0xf8] sm:$0xf]
    %v1252 = vld [vmem:[#allocation4 + $0xfc] sm:$0xf]
    %v1253 = vld [vmem:[%s6] sm:$0x1]
    %v1255 = vlaneseq
    %v1256 = vshrl.u32 %v1255, 7
    %v1257 = vsub.s32 0, %v1256
    %v1258 = vrot.slane %v1253, %v1257
    %v1324 = vunpack.c.l.b16 %v1189
    %v1325 = vunpack.c.l.b16 %v1190
    %v1326 = vunpack.c.l.b16 %v1191
    %v1327 = vunpack.c.l.b16 %v1192
    %v1328 = vunpack.c.l.b16 %v1193
    %v1329 = vunpack.c.l.b16 %v1194
    %v1330 = vunpack.c.l.b16 %v1195
    %v1331 = vunpack.c.l.b16 %v1196
    %v1332 = vunpack.c.l.b16 %v1197
    %v1333 = vunpack.c.l.b16 %v1198
    %v1334 = vunpack.c.l.b16 %v1199
    %v1335 = vunpack.c.l.b16 %v1200
    %v1336 = vunpack.c.l.b16 %v1201
    %v1337 = vunpack.c.l.b16 %v1202
    %v1338 = vunpack.c.l.b16 %v1203
    %v1339 = vunpack.c.l.b16 %v1204
    %v1340 = vunpack.c.l.b16 %v1205
    %v1341 = vunpack.c.l.b16 %v1206
    %v1342 = vunpack.c.l.b16 %v1207
    %v1343 = vunpack.c.l.b16 %v1208
    %v1344 = vunpack.c.l.b16 %v1209
    %v1345 = vunpack.c.l.b16 %v1210
    %v1346 = vunpack.c.l.b16 %v1211
    %v1347 = vunpack.c.l.b16 %v1212
    %v1348 = vunpack.c.l.b16 %v1213
    %v1349 = vunpack.c.l.b16 %v1214
    %v1350 = vunpack.c.l.b16 %v1215
    %v1351 = vunpack.c.l.b16 %v1216
    %v1352 = vunpack.c.l.b16 %v1217
    %v1353 = vunpack.c.l.b16 %v1218
    %v1354 = vunpack.c.l.b16 %v1219
    %v1355 = vunpack.c.l.b16 %v1220
    %v1356 = vunpack.c.l.b16 %v1221
    %v1357 = vunpack.c.l.b16 %v1222
    %v1358 = vunpack.c.l.b16 %v1223
    %v1359 = vunpack.c.l.b16 %v1224
    %v1360 = vunpack.c.l.b16 %v1225
    %v1361 = vunpack.c.l.b16 %v1226
    %v1362 = vunpack.c.l.b16 %v1227
    %v1363 = vunpack.c.l.b16 %v1228
    %v1364 = vunpack.c.l.b16 %v1229
    %v1365 = vunpack.c.l.b16 %v1230
    %v1366 = vunpack.c.l.b16 %v1231
    %v1367 = vunpack.c.l.b16 %v1232
    %v1368 = vunpack.c.l.b16 %v1233
    %v1369 = vunpack.c.l.b16 %v1234
    %v1370 = vunpack.c.l.b16 %v1235
    %v1371 = vunpack.c.l.b16 %v1236
    %v1372 = vunpack.c.l.b16 %v1237
    %v1373 = vunpack.c.l.b16 %v1238
    %v1374 = vunpack.c.l.b16 %v1239
    %v1375 = vunpack.c.l.b16 %v1240
    %v1376 = vunpack.c.l.b16 %v1241
    %v1377 = vunpack.c.l.b16 %v1242
    %v1378 = vunpack.c.l.b16 %v1243
    %v1379 = vunpack.c.l.b16 %v1244
    %v1380 = vunpack.c.l.b16 %v1245
    %v1381 = vunpack.c.l.b16 %v1246
    %v1382 = vunpack.c.l.b16 %v1247
    %v1383 = vunpack.c.l.b16 %v1248
    %v1384 = vunpack.c.l.b16 %v1249
    %v1385 = vunpack.c.l.b16 %v1250
    %v1386 = vunpack.c.l.b16 %v1251
    %v1387 = vunpack.c.l.b16 %v1252
    %v1388 = vpack.c.b16 %v1325, %v1324
    %v1389 = vpack.c.b16 %v1327, %v1326
    %v1390 = vpack.c.b16 %v1329, %v1328
    %v1391 = vpack.c.b16 %v1331, %v1330
    %v1392 = vpack.c.b16 %v1333, %v1332
    %v1393 = vpack.c.b16 %v1335, %v1334
    %v1394 = vpack.c.b16 %v1337, %v1336
    %v1395 = vpack.c.b16 %v1339, %v1338
    %v1396 = vpack.c.b16 %v1341, %v1340
    %v1397 = vpack.c.b16 %v1343, %v1342
    %v1398 = vpack.c.b16 %v1345, %v1344
    %v1399 = vpack.c.b16 %v1347, %v1346
    %v1400 = vpack.c.b16 %v1349, %v1348
    %v1401 = vpack.c.b16 %v1351, %v1350
    %v1402 = vpack.c.b16 %v1353, %v1352
    %v1403 = vpack.c.b16 %v1355, %v1354
    %v1404 = vpack.c.b16 %v1357, %v1356
    %v1405 = vpack.c.b16 %v1359, %v1358
    %v1406 = vpack.c.b16 %v1361, %v1360
    %v1407 = vpack.c.b16 %v1363, %v1362
    %v1408 = vpack.c.b16 %v1365, %v1364
    %v1409 = vpack.c.b16 %v1367, %v1366
    %v1410 = vpack.c.b16 %v1369, %v1368
    %v1411 = vpack.c.b16 %v1371, %v1370
    %v1412 = vpack.c.b16 %v1373, %v1372
    %v1413 = vpack.c.b16 %v1375, %v1374
    %v1414 = vpack.c.b16 %v1377, %v1376
    %v1415 = vpack.c.b16 %v1379, %v1378
    %v1416 = vpack.c.b16 %v1381, %v1380
    %v1417 = vpack.c.b16 %v1383, %v1382
    %v1418 = vpack.c.b16 %v1385, %v1384
    %v1419 = vpack.c.b16 %v1387, %v1386
    %1452 = vmatprep.subr.bf16.mxu0 0
    %1453 = vmatpush1.bf16.msra.mxu0 %v1388
    %1454 = vmatprep.subr.bf16.mxu0 0
    %1455 = vmatpush1.bf16.msra.mxu0 %v1389
    %1456 = vmatprep.subr.bf16.mxu0 0
    %1457 = vmatpush1.bf16.msra.mxu0 %v1390
    %1458 = vmatprep.subr.bf16.mxu0 0
    %1459 = vmatpush1.bf16.msra.mxu0 %v1391
    %1460 = vmatprep.subr.bf16.mxu0 0
    %1461 = vmatpush1.bf16.msra.mxu0 %v1392
    %1462 = vmatprep.subr.bf16.mxu0 0
    %1463 = vmatpush1.bf16.msra.mxu0 %v1393
    %1464 = vmatprep.subr.bf16.mxu0 0
    %1465 = vmatpush1.bf16.msra.mxu0 %v1394
    %1466 = vmatprep.subr.bf16.mxu0 0
    %1467 = vmatpush1.bf16.msra.mxu0 %v1395
    %1468 = vmatprep.subr.bf16.mxu0 0
    %1469 = vmatpush1.bf16.msra.mxu0 %v1396
    %1470 = vmatprep.subr.bf16.mxu0 0
    %1471 = vmatpush1.bf16.msra.mxu0 %v1397
    %1472 = vmatprep.subr.bf16.mxu0 0
    %1473 = vmatpush1.bf16.msra.mxu0 %v1398
    %1474 = vmatprep.subr.bf16.mxu0 0
    %1475 = vmatpush1.bf16.msra.mxu0 %v1399
    %1476 = vmatprep.subr.bf16.mxu0 0
    %1477 = vmatpush1.bf16.msra.mxu0 %v1400
    %1478 = vmatprep.subr.bf16.mxu0 0
    %1479 = vmatpush1.bf16.msra.mxu0 %v1401
    %1480 = vmatprep.subr.bf16.mxu0 0
    %1481 = vmatpush1.bf16.msra.mxu0 %v1402
    %1482 = vmatprep.subr.bf16.mxu0 0
    %1483 = vmatpush1.bf16.msra.mxu0 %v1403
    %1484 = vmatprep.mubr.bf16.mxu0 %v1186
    %1485 = vmatmul.mubr.bf16.gmra.mrb[0].mxu0 %v1185
    %v1486 = vpop.f32.mrb[0].mxu0
    %v1487 = vadd.f32 %v1258, %v1486
    %v1488 = vpop.f32.mrb[0].mxu0
    %v1489 = vpop.f32.mrb[0].mxu0
    %v1490 = vadd.f32 %v1258, %v1489
    %v1491 = vpop.f32.mrb[0].mxu0
    %1492 = vdwg.mxu0
    %1493 = vmatprep.subr.bf16.mxu0 0
    %1494 = vmatpush1.bf16.msra.mxu0 %v1404
    %1495 = vmatprep.subr.bf16.mxu0 0
    %1496 = vmatpush1.bf16.msra.mxu0 %v1405
    %1497 = vmatprep.subr.bf16.mxu0 0
    %1498 = vmatpush1.bf16.msra.mxu0 %v1406
    %1499 = vmatprep.subr.bf16.mxu0 0
    %1500 = vmatpush1.bf16.msra.mxu0 %v1407
    %1501 = vmatprep.subr.bf16.mxu0 0
    %1502 = vmatpush1.bf16.msra.mxu0 %v1408
    %1503 = vmatprep.subr.bf16.mxu0 0
    %1504 = vmatpush1.bf16.msra.mxu0 %v1409
    %1505 = vmatprep.subr.bf16.mxu0 0
    %1506 = vmatpush1.bf16.msra.mxu0 %v1410
    %1507 = vmatprep.subr.bf16.mxu0 0
    %1508 = vmatpush1.bf16.msra.mxu0 %v1411
    %1509 = vmatprep.subr.bf16.mxu0 0
    %1510 = vmatpush1.bf16.msra.mxu0 %v1412
    %1511 = vmatprep.subr.bf16.mxu0 0
    %1512 = vmatpush1.bf16.msra.mxu0 %v1413
    %1513 = vmatprep.subr.bf16.mxu0 0
    %1514 = vmatpush1.bf16.msra.mxu0 %v1414
    %1515 = vmatprep.subr.bf16.mxu0 0
    %1516 = vmatpush1.bf16.msra.mxu0 %v1415
    %1517 = vmatprep.subr.bf16.mxu0 0
    %1518 = vmatpush1.bf16.msra.mxu0 %v1416
    %1519 = vmatprep.subr.bf16.mxu0 0
    %1520 = vmatpush1.bf16.msra.mxu0 %v1417
    %1521 = vmatprep.subr.bf16.mxu0 0
    %1522 = vmatpush1.bf16.msra.mxu0 %v1418
    %1523 = vmatprep.subr.bf16.mxu0 0
    %1524 = vmatpush1.bf16.msra.mxu0 %v1419
    %1525 = vmatprep.mubr.bf16.mxu0 %v1188
    %1526 = vmatmul.mubr.bf16.gmra.mrb[0].mxu0 %v1187
    %v1527 = vpop.f32.mrb[0].mxu0
    %v1528 = vadd.f32 %v1487, %v1527
    %v1529 = vpop.f32.mrb[0].mxu0
    %v1530 = vpop.f32.mrb[0].mxu0
    %v1531 = vadd.f32 %v1490, %v1530
    %v1532 = vpop.f32.mrb[0].mxu0
    %1533 = vdwg.mxu0
    %1534 = vst [vmem:[%s7] sm:$0xff] %v1528
    %1535 = vst [vmem:[%s7 + $0x8] sm:$0xff] %v1531
    // Predicated region
    $region38: #{mlp_state_forward.1} parent=1 // pred_check
      _
    $region39: #{mlp_state_forward.1} parent=1 // pred_check_branch
      %1537 = sbr.rel (0) target = $region41
    $region40: #{mlp_state_forward.1} parent=1 // pred_region
      _
    $region41: #{mlp_state_forward.1} parent=1 // pred_fallthru
      _
    // Predicated region
    $region42: #{mlp_state_forward.1} parent=1 // pred_check
      _
    $region43: #{mlp_state_forward.1} parent=1 // pred_check_branch
      %1539 = sbr.rel (0) target = $region45
    $region44: #{mlp_state_forward.1} parent=1 // pred_region
      _
    $region45: #{mlp_state_forward.1} parent=1 // pred_fallthru
      _
    %1540 = vsyncpa [#allocation3], 1
    %1541 = vsyncpa [#allocation5], 1

</llo_original>
